<compile_context>
chip_gen: v7x
topology: tpu7x:2x2x1
jax: 0.10.0
libtpu: 0.0.40
codegen_flags: <defaults>
</compile_context>

<pallas_src>
import math
import numpy as np
import jax
import jax.numpy as jnp
from jax import lax
from jax.experimental import pallas as pl
from jax.experimental.pallas import tpu as pltpu


# ----------------------------- helpers -------------------------------------- #

def _round_up(x, m):
    return ((x + m - 1) // m) * m


def _pick_batch_tile(B, Cin, Cout, HW, scratch_w, budget_bytes=8 << 20):
    """How many images to fold into the channel/sublane axis per grid step."""
    per_img = 4 * (2 * Cin * HW + Cin * scratch_w + 2 * Cout * HW)  # in(x2 buf)+scratch+out(x2 buf)
    divs = [d for d in range(1, B + 1) if B % d == 0]
    fits = [d for d in divs if d * per_img <= budget_bytes] or [1]
    # respect the (8,128) block rule on the sublane dim unless the block covers the full array
    aligned = [d for d in fits if d == B or ((d * Cin) % 8 == 0 and (d * Cout) % 8 == 0)]
    pool = aligned or fits
    filled = [d for d in pool if d * Cin >= 8]        # smallest tile that fills a sublane vreg
    return min(filled) if filled else max(pool)


# ----------------------------- fused Pallas kernel -------------------------- #

def fused_dwconv_proj(x_flat, dw_taps, proj_w, *, B, Cin, Cout, H, W, K):
    """Fused depthwise KxK 'same' conv + 1x1 projection.

    x_flat : (B*Cin, H*W)   NCHW input, batch+channel on sublanes, spatial on lanes
    dw_taps: (K*K, Cin, 1)  per-channel depthwise taps, tap index = dy*K + dx
    proj_w : (Cout, Cin)    1x1 projection weight
    returns: (B*Cout, H*W)
    """
    HW = H * W
    assert x_flat.shape == (B * Cin, HW)
    p = (K - 1) // 2
    guard = p * (W + 1)                      # halo needed on each side of a flat row
    fill_off = _round_up(guard, 128)         # lane-aligned interior start (unmasked vst)
    scratch_w = fill_off + HW + guard        # padded, flattened per-channel row length
    base = fill_off - guard                  # tap (dy,dx) reads at base + dy*W + dx + q

    bt = _pick_batch_tile(B, Cin, Cout, HW, scratch_w)
    BT_CIN, BT_COUT = bt * Cin, bt * Cout

    # per-channel taps replicated per folded image: (K*K, bt*Cin, 1), lane-broadcast column
    taps = jnp.tile(dw_taps, (1, bt, 1))
    # block-diagonal projection so a single MXU dot projects every folded image
    projb = jnp.kron(jnp.eye(bt, dtype=proj_w.dtype), proj_w)          # (bt*Cout, bt*Cin)

    # 0/1 lane masks killing taps that would read across a row (W) boundary
    wpos = np.arange(HW) % W
    masks = np.stack(
        [((wpos >= p - dx) & (wpos < W + p - dx)).astype(np.float32) for dx in range(K)]
    )                                                                  # (K, HW)
    masks = jnp.asarray(masks)

    def kernel(x_ref, w_ref, m_ref, p_ref, o_ref, pad_ref):
        # x_ref: (bt*Cin, HW)      w_ref: (K*K, bt*Cin, 1)   m_ref: (K, HW)
        # p_ref: (bt*Cout, bt*Cin) o_ref: (bt*Cout, HW)      pad_ref: (bt*Cin, scratch_w) VMEM
        # --- on-chip "same" padding: zero only the guard bands, overwrite the interior ---
        pad_ref[:, :fill_off] = jnp.zeros((BT_CIN, fill_off), jnp.float32)
        pad_ref[:, fill_off + HW:] = jnp.zeros((BT_CIN, scratch_w - fill_off - HW), jnp.float32)
        pad_ref[:, fill_off:fill_off + HW] = x_ref[...].astype(jnp.float32)   # aligned store

        # --- depthwise KxK conv via lane-shifted reads, f32 accumulation on the VPU ---
        acc = jnp.zeros((BT_CIN, HW), jnp.float32)
        for dx in range(K):
            part = jnp.zeros((BT_CIN, HW), jnp.float32)
            for dy in range(K):
                s = base + dy * W + dx                          # static shift per tap
                # (bt*Cin,1) tap broadcasts along lanes; slice stays lane-dense (HW wide)
                part = part + w_ref[dy * K + dx] * pad_ref[:, s:s + HW]
            # center column needs no W-boundary mask
            acc = acc + (part if dx == p else part * m_ref[dx:dx + 1, :])

        # --- block-diagonal 1x1 projection on the MXU: contract bt*Cin, keep H*W on lanes ---
        o_ref[...] = jnp.dot(
            p_ref[...].astype(jnp.float32), acc, preferred_element_type=jnp.float32
        ).astype(o_ref.dtype)

    return pl.pallas_call(
        kernel,
        out_shape=jax.ShapeDtypeStruct((B * Cout, HW), x_flat.dtype),
        grid_spec=pltpu.PrefetchScalarGridSpec(
            num_scalar_prefetch=0,
            grid=(B // bt,),
            in_specs=[
                pl.BlockSpec((BT_CIN, HW), lambda i: (i, 0)),
                pl.BlockSpec((K * K, BT_CIN, 1), lambda i: (0, 0, 0)),
                pl.BlockSpec((K, HW), lambda i: (0, 0)),
                pl.BlockSpec((BT_COUT, BT_CIN), lambda i: (0, 0)),
            ],
            out_specs=pl.BlockSpec((BT_COUT, HW), lambda i: (i, 0)),
            scratch_shapes=[pltpu.VMEM((BT_CIN, scratch_w), jnp.float32)],
        ),
        compiler_params=pltpu.CompilerParams(dimension_semantics=("parallel",)),
    )(x_flat, taps, masks, projb)


# -------------------- parameter / APSeDCT kernel construction --------------- #

def ap_dct_matrix(N):
    T = np.zeros((N, N), dtype=np.float32)
    for i in range(N):
        for u in range(N):
            if u == 0:
                T[i, u] = (N - i) / N ** 2
            else:
                T[i, u] = ((N - i) * math.cos(math.pi * u * i / N)
                           - math.sin(math.pi * u * i / N) / math.sin(math.pi * u / N)) / N ** 2
    return jnp.asarray(T)


def apsedct_weights(channels, kernel_size, se_weight):
    """Replicates MyAPSeDCTConv2d kernel: Q = reflect_pad(G @ relu(Se) @ G^T)."""
    N = (kernel_size + 1) // 2
    G = ap_dct_matrix(N)                                   # (N, N), shared by channels
    Se = jax.nn.relu(se_weight)                            # (C, N, N)
    Qq = jnp.einsum('ij,cjk,lk->cil', G, Se, G)            # per-channel G @ Se @ G^T
    idx = jnp.abs(jnp.arange(2 * N - 1) - (N - 1))         # reflect pad by N-1 on left/top
    Q = Qq[:, idx, :][:, :, idx]                           # (C, 2N-1, 2N-1)
    return Q


class MultiAPSeDCTPallas:
    def __init__(self, in_channels, out_channels, kernel_size, groups=1, key=None):
        if isinstance(kernel_size, int):
            kernel_size = {kernel_size: 1}
        heads = sum(kernel_size.values())
        assert in_channels % heads == 0
        assert groups == 1     # TODO(synk): grouped 1x1 projection not implemented
        Ch = in_channels // heads
        self.in_channels, self.out_channels = in_channels, out_channels
        key = jax.random.PRNGKey(42) if key is None else key
        k_dw, k_proj = jax.random.split(key)

        per_split_w, eff_ks = [], []
        for ks, nh in kernel_size.items():
            Cs = nh * Ch
            if ks == 1:
                # nn.Conv2d(Cs, Cs, 3, padding=1, groups=Cs, bias=False)
                bound = 1.0 / math.sqrt(9.0)
                k_dw, sub = jax.random.split(k_dw)
                w = jax.random.uniform(sub, (Cs, 3, 3), jnp.float32, -bound, bound)
                K = 3
            else:
                N = (ks + 1) // 2
                se = jnp.ones((Cs, N, N), jnp.float32)     # nn.Parameter(torch.ones(...))
                w = apsedct_weights(Cs, ks, se)            # (Cs, ks, ks)
                K = ks
            per_split_w.append(w)
            eff_ks.append(K)

        # zero-embed every split kernel centered in a common Kmax (identical conv result)
        Kmax = max(eff_ks)
        padded = []
        for w, K in zip(per_split_w, eff_ks):
            q = (Kmax - K) // 2
            padded.append(jnp.pad(w, ((0, 0), (q, q), (q, q))))
        self.K = Kmax
        self.dw_kernels = jnp.concatenate(padded, axis=0)          # (Cin, K, K)  (reference)
        # kernel-side layout: tap-major, channels on sublanes, trailing singleton lane
        self.dw_taps = jnp.transpose(self.dw_kernels, (1, 2, 0)).reshape(
            Kmax * Kmax, in_channels)[:, :, None]                  # (K*K, Cin, 1)

        # 1x1 projection weight (Cout, Cin)
        bound = 1.0 / math.sqrt(float(in_channels))
        self.proj_weight = jax.random.uniform(
            k_proj, (out_channels, in_channels), jnp.float32, -bound, bound)

    def __call__(self, x_nchw):
        B, C, H, W = x_nchw.shape
        assert C == self.in_channels
        x_flat = x_nchw.reshape(B * C, H * W)         # free reshape (contiguous NCHW)
        out_flat = fused_dwconv_proj(x_flat, self.dw_taps, self.proj_weight,
                                     B=B, Cin=C, Cout=self.out_channels,
                                     H=H, W=W, K=self.K)
        return out_flat.reshape(B, self.out_channels, H, W)


# ----------------------------- plain-JAX reference -------------------------- #

def reference(x_nchw, dw_ckk, proj_oc):
    C = x_nchw.shape[1]
    w = dw_ckk[:, None, :, :]                                # (C, 1, K, K) OIHW
    y = lax.conv_general_dilated(
        x_nchw, w, window_strides=(1, 1), padding='SAME',
        feature_group_count=C,
        dimension_numbers=('NCHW', 'OIHW', 'NCHW'))
    return jnp.einsum('oc,bchw->bohw', proj_oc, y)


if __name__ == "__main__":
    B, Cin, H, W = 2, 4, 16, 16
    Cout = 8

    x = jax.random.normal(jax.random.PRNGKey(0), (B, Cin, H, W), dtype=jnp.float32)

    # two head splits: one "kernel_size=1" (learned 3x3 depthwise) + one APSeDCT k=3
    model = MultiAPSeDCTPallas(Cin, Cout, kernel_size={1: 1, 3: 1}, groups=1,
                               key=jax.random.PRNGKey(42))

    out = jax.block_until_ready(model(x))

    ref = reference(x, model.dw_kernels, model.proj_weight)
    assert out.shape == (B, Cout, H, W), out.shape
    assert jnp.allclose(out, ref, atol=1e-4, rtol=1e-4), float(jnp.abs(out - ref).max())

    print("KERNEL_OK")
</pallas_src>

<mosaic_0001>
module attributes {stable_mosaic.version = 11 : i64} {
  func.func @kernel(%arg0: i32, %arg1: memref<8x256xf32, #tpu.memory_space<vmem>>, %arg2: memref<9x8x1xf32, #tpu.memory_space<vmem>>, %arg3: memref<3x256xf32, #tpu.memory_space<vmem>>, %arg4: memref<16x8xf32, #tpu.memory_space<vmem>>, %arg5: memref<16x256xf32, #tpu.memory_space<vmem>>, %arg6: memref<8x401xf32, #tpu.memory_space<vmem>>) attributes {dimension_semantics = [#tpu.dimension_semantics<parallel>], iteration_bounds = array<i64: 1>, scalar_prefetch = 0 : i64, scratch_operands = 1 : i64, tpu.core_type = #tpu.core_type<tc>, window_params = [{transform_indices = @transform_0, window_bounds = array<i64: 8, 256>}, {pipeline_mode = #tpu.pipeline_mode<synchronous>, transform_indices = @transform_1, window_bounds = array<i64: 9, 8, 1>}, {pipeline_mode = #tpu.pipeline_mode<synchronous>, transform_indices = @transform_2, window_bounds = array<i64: 3, 256>}, {pipeline_mode = #tpu.pipeline_mode<synchronous>, transform_indices = @transform_3, window_bounds = array<i64: 16, 8>}, {transform_indices = @transform_4, window_bounds = array<i64: 16, 256>}]} {
    %cst = arith.constant 0.000000e+00 : f32
    %0 = vector.broadcast %cst : f32 to vector<8x128xf32>
    %c0 = arith.constant 0 : index
    %c0_0 = arith.constant 0 : index
    %1 = vector.load %arg6[%c0, %c0_0] : memref<8x401xf32, #tpu.memory_space<vmem>>, vector<8x128xf32>
    tpu.vector_store %arg6[%c0, %c0_0], %0 {strides = array<i32>} : memref<8x401xf32, #tpu.memory_space<vmem>>, vector<8x128xf32>,
    %cst_1 = arith.constant 0.000000e+00 : f32
    %2 = vector.broadcast %cst_1 : f32 to vector<8x17xf32>
    %c0_2 = arith.constant 0 : index
    %c384 = arith.constant 384 : index
    %3 = vector.load %arg6[%c0_2, %c384] : memref<8x401xf32, #tpu.memory_space<vmem>>, vector<8x17xf32>
    tpu.vector_store %arg6[%c0_2, %c384], %2 {strides = array<i32>} : memref<8x401xf32, #tpu.memory_space<vmem>>, vector<8x17xf32>,
    %c0_3 = arith.constant 0 : index
    %c0_4 = arith.constant 0 : index
    %4 = vector.load %arg1[%c0_3, %c0_4] : memref<8x256xf32, #tpu.memory_space<vmem>>, vector<8x256xf32>
    %c0_5 = arith.constant 0 : index
    %c128 = arith.constant 128 : index
    %5 = vector.load %arg6[%c0_5, %c128] : memref<8x401xf32, #tpu.memory_space<vmem>>, vector<8x256xf32>
    tpu.vector_store %arg6[%c0_5, %c128], %4 {strides = array<i32>} : memref<8x401xf32, #tpu.memory_space<vmem>>, vector<8x256xf32>,
    %cst_6 = arith.constant 0.000000e+00 : f32
    %6 = vector.broadcast %cst_6 : f32 to vector<8x256xf32>
    %cst_7 = arith.constant 0.000000e+00 : f32
    %7 = vector.broadcast %cst_7 : f32 to vector<8x256xf32>
    %c0_8 = arith.constant 0 : index
    %c0_9 = arith.constant 0 : index
    %c0_10 = arith.constant 0 : index
    %8 = vector.load %arg2[%c0_8, %c0_9, %c0_10] : memref<9x8x1xf32, #tpu.memory_space<vmem>>, vector<1x8x1xf32>
    %9 = vector.shape_cast %8 : vector<1x8x1xf32> to vector<8x1xf32>
    %c0_11 = arith.constant 0 : index
    %c111 = arith.constant 111 : index
    %10 = vector.load %arg6[%c0_11, %c111] : memref<8x401xf32, #tpu.memory_space<vmem>>, vector<8x256xf32>
    %11 = vector.broadcast %9 : vector<8x1xf32> to vector<8x256xf32>
    %12 = arith.mulf %11, %10 : vector<8x256xf32>
    %13 = arith.addf %7, %12 : vector<8x256xf32>
    %c3 = arith.constant 3 : index
    %c0_12 = arith.constant 0 : index
    %c0_13 = arith.constant 0 : index
    %14 = vector.load %arg2[%c3, %c0_12, %c0_13] : memref<9x8x1xf32, #tpu.memory_space<vmem>>, vector<1x8x1xf32>
    %15 = vector.shape_cast %14 : vector<1x8x1xf32> to vector<8x1xf32>
    %c0_14 = arith.constant 0 : index
    %c127 = arith.constant 127 : index
    %16 = vector.load %arg6[%c0_14, %c127] : memref<8x401xf32, #tpu.memory_space<vmem>>, vector<8x256xf32>
    %17 = vector.broadcast %15 : vector<8x1xf32> to vector<8x256xf32>
    %18 = arith.mulf %17, %16 : vector<8x256xf32>
    %19 = arith.addf %13, %18 : vector<8x256xf32>
    %c6 = arith.constant 6 : index
    %c0_15 = arith.constant 0 : index
    %c0_16 = arith.constant 0 : index
    %20 = vector.load %arg2[%c6, %c0_15, %c0_16] : memref<9x8x1xf32, #tpu.memory_space<vmem>>, vector<1x8x1xf32>
    %21 = vector.shape_cast %20 : vector<1x8x1xf32> to vector<8x1xf32>
    %c0_17 = arith.constant 0 : index
    %c143 = arith.constant 143 : index
    %22 = vector.load %arg6[%c0_17, %c143] : memref<8x401xf32, #tpu.memory_space<vmem>>, vector<8x256xf32>
    %23 = vector.broadcast %21 : vector<8x1xf32> to vector<8x256xf32>
    %24 = arith.mulf %23, %22 : vector<8x256xf32>
    %25 = arith.addf %19, %24 : vector<8x256xf32>
    %c0_18 = arith.constant 0 : index
    %c0_19 = arith.constant 0 : index
    %26 = vector.load %arg3[%c0_18, %c0_19] : memref<3x256xf32, #tpu.memory_space<vmem>>, vector<1x256xf32>
    %27 = vector.broadcast %26 : vector<1x256xf32> to vector<8x256xf32>
    %28 = arith.mulf %25, %27 : vector<8x256xf32>
    %29 = arith.addf %6, %28 : vector<8x256xf32>
    %cst_20 = arith.constant 0.000000e+00 : f32
    %30 = vector.broadcast %cst_20 : f32 to vector<8x256xf32>
    %c1 = arith.constant 1 : index
    %c0_21 = arith.constant 0 : index
    %c0_22 = arith.constant 0 : index
    %31 = vector.load %arg2[%c1, %c0_21, %c0_22] : memref<9x8x1xf32, #tpu.memory_space<vmem>>, vector<1x8x1xf32>
    %32 = vector.shape_cast %31 : vector<1x8x1xf32> to vector<8x1xf32>
    %c0_23 = arith.constant 0 : index
    %c112 = arith.constant 112 : index
    %33 = vector.load %arg6[%c0_23, %c112] : memref<8x401xf32, #tpu.memory_space<vmem>>, vector<8x256xf32>
    %34 = vector.broadcast %32 : vector<8x1xf32> to vector<8x256xf32>
    %35 = arith.mulf %34, %33 : vector<8x256xf32>
    %36 = arith.addf %30, %35 : vector<8x256xf32>
    %c4 = arith.constant 4 : index
    %c0_24 = arith.constant 0 : index
    %c0_25 = arith.constant 0 : index
    %37 = vector.load %arg2[%c4, %c0_24, %c0_25] : memref<9x8x1xf32, #tpu.memory_space<vmem>>, vector<1x8x1xf32>
    %38 = vector.shape_cast %37 : vector<1x8x1xf32> to vector<8x1xf32>
    %c0_26 = arith.constant 0 : index
    %c128_27 = arith.constant 128 : index
    %39 = vector.load %arg6[%c0_26, %c128_27] : memref<8x401xf32, #tpu.memory_space<vmem>>, vector<8x256xf32>
    %40 = vector.broadcast %38 : vector<8x1xf32> to vector<8x256xf32>
    %41 = arith.mulf %40, %39 : vector<8x256xf32>
    %42 = arith.addf %36, %41 : vector<8x256xf32>
    %c7 = arith.constant 7 : index
    %c0_28 = arith.constant 0 : index
    %c0_29 = arith.constant 0 : index
    %43 = vector.load %arg2[%c7, %c0_28, %c0_29] : memref<9x8x1xf32, #tpu.memory_space<vmem>>, vector<1x8x1xf32>
    %44 = vector.shape_cast %43 : vector<1x8x1xf32> to vector<8x1xf32>
    %c0_30 = arith.constant 0 : index
    %c144 = arith.constant 144 : index
    %45 = vector.load %arg6[%c0_30, %c144] : memref<8x401xf32, #tpu.memory_space<vmem>>, vector<8x256xf32>
    %46 = vector.broadcast %44 : vector<8x1xf32> to vector<8x256xf32>
    %47 = arith.mulf %46, %45 : vector<8x256xf32>
    %48 = arith.addf %42, %47 : vector<8x256xf32>
    %49 = arith.addf %29, %48 : vector<8x256xf32>
    %cst_31 = arith.constant 0.000000e+00 : f32
    %50 = vector.broadcast %cst_31 : f32 to vector<8x256xf32>
    %c2 = arith.constant 2 : index
    %c0_32 = arith.constant 0 : index
    %c0_33 = arith.constant 0 : index
    %51 = vector.load %arg2[%c2, %c0_32, %c0_33] : memref<9x8x1xf32, #tpu.memory_space<vmem>>, vector<1x8x1xf32>
    %52 = vector.shape_cast %51 : vector<1x8x1xf32> to vector<8x1xf32>
    %c0_34 = arith.constant 0 : index
    %c113 = arith.constant 113 : index
    %53 = vector.load %arg6[%c0_34, %c113] : memref<8x401xf32, #tpu.memory_space<vmem>>, vector<8x256xf32>
    %54 = vector.broadcast %52 : vector<8x1xf32> to vector<8x256xf32>
    %55 = arith.mulf %54, %53 : vector<8x256xf32>
    %56 = arith.addf %50, %55 : vector<8x256xf32>
    %c5 = arith.constant 5 : index
    %c0_35 = arith.constant 0 : index
    %c0_36 = arith.constant 0 : index
    %57 = vector.load %arg2[%c5, %c0_35, %c0_36] : memref<9x8x1xf32, #tpu.memory_space<vmem>>, vector<1x8x1xf32>
    %58 = vector.shape_cast %57 : vector<1x8x1xf32> to vector<8x1xf32>
    %c0_37 = arith.constant 0 : index
    %c129 = arith.constant 129 : index
    %59 = vector.load %arg6[%c0_37, %c129] : memref<8x401xf32, #tpu.memory_space<vmem>>, vector<8x256xf32>
    %60 = vector.broadcast %58 : vector<8x1xf32> to vector<8x256xf32>
    %61 = arith.mulf %60, %59 : vector<8x256xf32>
    %62 = arith.addf %56, %61 : vector<8x256xf32>
    %c8 = arith.constant 8 : index
    %c0_38 = arith.constant 0 : index
    %c0_39 = arith.constant 0 : index
    %63 = vector.load %arg2[%c8, %c0_38, %c0_39] : memref<9x8x1xf32, #tpu.memory_space<vmem>>, vector<1x8x1xf32>
    %64 = vector.shape_cast %63 : vector<1x8x1xf32> to vector<8x1xf32>
    %c0_40 = arith.constant 0 : index
    %c145 = arith.constant 145 : index
    %65 = vector.load %arg6[%c0_40, %c145] : memref<8x401xf32, #tpu.memory_space<vmem>>, vector<8x256xf32>
    %66 = vector.broadcast %64 : vector<8x1xf32> to vector<8x256xf32>
    %67 = arith.mulf %66, %65 : vector<8x256xf32>
    %68 = arith.addf %62, %67 : vector<8x256xf32>
    %c2_41 = arith.constant 2 : index
    %c0_42 = arith.constant 0 : index
    %69 = vector.load %arg3[%c2_41, %c0_42] : memref<3x256xf32, #tpu.memory_space<vmem>>, vector<1x256xf32>
    %70 = vector.broadcast %69 : vector<1x256xf32> to vector<8x256xf32>
    %71 = arith.mulf %68, %70 : vector<8x256xf32>
    %72 = arith.addf %49, %71 : vector<8x256xf32>
    %c0_43 = arith.constant 0 : index
    %c0_44 = arith.constant 0 : index
    %73 = vector.load %arg4[%c0_43, %c0_44] : memref<16x8xf32, #tpu.memory_space<vmem>>, vector<16x8xf32>
    %cst_45 = arith.constant dense<0.000000e+00> : vector<16x256xf32>
    %74 = tpu.matmul %73, %72, %cst_45 {dimension_numbers = #tpu.dot_dimension_numbers<[1], [0], [0], [1], [0, 0, 1, 1], [], []>} : vector<16x8xf32>, vector<8x256xf32>, vector<16x256xf32> -> vector<16x256xf32>
    %c0_46 = arith.constant 0 : index
    %c0_47 = arith.constant 0 : index
    %75 = vector.load %arg5[%c0_46, %c0_47] : memref<16x256xf32, #tpu.memory_space<vmem>>, vector<16x256xf32>
    tpu.vector_store %arg5[%c0_46, %c0_47], %74 {strides = array<i32>} : memref<16x256xf32, #tpu.memory_space<vmem>>, vector<16x256xf32>,
    return
  }
  func.func @transform_0(%arg0: i32) -> (i32, i32) {
    %c0_i32 = arith.constant 0 : i32
    %c0_i32_0 = arith.constant 0 : i32
    return %arg0, %c0_i32 : i32, i32
  }
  func.func @transform_1(%arg0: i32) -> (i32, i32, i32) {
    %c0_i32 = arith.constant 0 : i32
    %c0_i32_0 = arith.constant 0 : i32
    %c0_i32_1 = arith.constant 0 : i32
    %c0_i32_2 = arith.constant 0 : i32
    return %c0_i32, %c0_i32_0, %c0_i32_1 : i32, i32, i32
  }
  func.func @transform_2(%arg0: i32) -> (i32, i32) {
    %c0_i32 = arith.constant 0 : i32
    %c0_i32_0 = arith.constant 0 : i32
    %c0_i32_1 = arith.constant 0 : i32
    return %c0_i32, %c0_i32_0 : i32, i32
  }
  func.func @transform_3(%arg0: i32) -> (i32, i32) {
    %c0_i32 = arith.constant 0 : i32
    %c0_i32_0 = arith.constant 0 : i32
    %c0_i32_1 = arith.constant 0 : i32
    return %c0_i32, %c0_i32_0 : i32, i32
  }
  func.func @transform_4(%arg0: i32) -> (i32, i32) {
    %c0_i32 = arith.constant 0 : i32
    %c0_i32_0 = arith.constant 0 : i32
    return %arg0, %c0_i32 : i32, i32
  }
}

</mosaic_0001>

<llo_original>
// kernel: tpu_custom_call.1
$region0: #{tpu_custom_call.1}
  #allocation0 [shape = 'u32[]', space=smem, size = 0x4, offset = 0x4, fixed_abs, tag = 'smem constant byte address 0x4 - core index']
  #allocation1 [shape = 'u32[144,128]{1,0:T(1,128)}', space=vmem, size = 0x12000, scoped, tag = 'internal scratch']
  #allocation2 [shape = 'f32[8,401]{1,0:T(8,128)}', space=vmem, size = 0x4000, scoped, tag = 'scratch operand']
  %s0 = inlined_call_operand.vmem [shape: f32[8,256], index: 0, kind: input, shape index: {}]
  %s1 = inlined_call_operand.vmem [shape: f32[9,8,1], index: 1, kind: input, shape index: {}]
  %s2 = inlined_call_operand.vmem [shape: f32[3,256], index: 2, kind: input, shape index: {}]
  %s3 = inlined_call_operand.vmem [shape: f32[16,8], index: 3, kind: input, shape index: {}]
  %s4 = inlined_call_operand.hbm [shape: f32[16,256], index: 4, kind: output, shape index: {}]
  %s5 = sld [smem:[#allocation0]]
  $region26: #{tpu_custom_call.1} parent=0
    _
  %s7 = ssub.s32 1, %s5
  %s8 = scalar_select 0, %s7, %s5
  $region1: #{tpu_custom_call.1} parent=0
    #allocation3 [shape = 'u8[16384]{0}', space=vmem, size = 0x4000, scoped, tag = 'output window, operand 0, single buffered']
    #allocation4 [shape = 's32[1]{0}', space=sflag, size = 0x4, scoped, tag = 'scoped memory for tpu_custom_call.1']
    %9 = vsyncpa [#allocation4], 0
    // Predicated region
    $region2: #{tpu_custom_call.1} parent=1 // pred_check
      _
    $region3: #{tpu_custom_call.1} parent=1 // pred_check_branch
      %11 = sbr.rel (0) target = $region5
    $region4: #{tpu_custom_call.1} parent=1 // pred_region
      _
    $region5: #{tpu_custom_call.1} parent=1 // pred_fallthru
      _
    // Predicated region
    $region6: #{tpu_custom_call.1} parent=1 // pred_check
      _
    $region7: #{tpu_custom_call.1} parent=1 // pred_check_branch
      %13 = sbr.rel (0) target = $region9
    $region8: #{tpu_custom_call.1} parent=1 // pred_region
      _
    $region9: #{tpu_custom_call.1} parent=1 // pred_fallthru
      _
    // Predicated region
    $region10: #{tpu_custom_call.1} parent=1 // pred_check
      _
    $region11: #{tpu_custom_call.1} parent=1 // pred_check_branch
      %15 = sbr.rel (0) target = $region13
    $region12: #{tpu_custom_call.1} parent=1 // pred_region
      _
    $region13: #{tpu_custom_call.1} parent=1 // pred_fallthru
      _
    // Predicated region
    $region14: #{tpu_custom_call.1} parent=1 // pred_check
      _
    $region15: #{tpu_custom_call.1} parent=1 // pred_check_branch
      %17 = sbr.rel (0) target = $region17
    $region16: #{tpu_custom_call.1} parent=1 // pred_region
      _
    $region17: #{tpu_custom_call.1} parent=1 // pred_fallthru
      _
    %18 = vst [vmem:[#allocation2] sm:$0xff] 0.0
    %vm19 = vcmask 138240
    %20 = vst.msk [vmem:[#allocation2 + $0x18] sm:$0xff] %vm19, 0.0
    %v21 = vld [vmem:[%s0] sm:$0xff]
    %v22 = vld [vmem:[%s0 + $0x8] sm:$0xff]
    %23 = vst [vmem:[#allocation2 + $0x8] sm:$0xff] %v21
    %24 = vst [vmem:[#allocation2 + $0x10] sm:$0xff] %v22
    %v25 = vld [vmem:[%s1] sm:$0xff]
    %v26 = vld [vmem:[#allocation2] sm:$0xff]
    %v27 = vld [vmem:[#allocation2 + $0x8] sm:$0xff]
    %v28 = vld [vmem:[#allocation2 + $0x10] sm:$0xff]
    %30 = vset.pattern.permute.xlu0 0
    %31 = vperm.xlu0 %30, %v25
    %v32 = vpop.permute.xlu0 %31
    %v34 = vmul.f32 %v32, %v26
    %v35 = vmul.f32 %v32, %v27
    %v36 = vmul.f32 %v32, %v28
    %v37 = vadd.f32 %v34, 0.0
    %v38 = vadd.f32 %v35, 0.0
    %v39 = vadd.f32 %v36, 0.0
    %s40 = scalar_lea.vmem %s1, 24
    %v41 = vld [vmem:[%s40] sm:$0xff]
    %43 = vset.pattern.permute.xlu0 0
    %44 = vperm.xlu0 %43, %v41
    %v45 = vpop.permute.xlu0 %44
    %v47 = vmul.f32 %v45, %v26
    %v48 = vmul.f32 %v45, %v27
    %v49 = vmul.f32 %v45, %v28
    %53 = vrot.lane.b32.xlu0 %v47, 112
    %v54 = vpop.permute.xlu0 %53
    %55 = vrot.lane.b32.xlu0 %v48, 112
    %v56 = vpop.permute.xlu0 %55
    %57 = vrot.lane.b32.xlu0 %v49, 112
    %v58 = vpop.permute.xlu0 %57
    %vm59 = vcmask 916480
    %v60 = vsel %vm59, %v54, %v56
    %v61 = vsel %vm59, %v56, %v58
    %v65 = vadd.f32 %v37, %v60
    %v66 = vadd.f32 %v38, %v61
    %v67 = vadd.f32 %v39, %v58
    %s68 = scalar_lea.vmem %s1, 48
    %v69 = vld [vmem:[%s68] sm:$0xff]
    %v70 = vld [vmem:[#allocation2 + $0x8] sm:$0xff]
    %v71 = vld [vmem:[#allocation2 + $0x10] sm:$0xff]
    %v72 = vld [vmem:[#allocation2 + $0x18] sm:$0xff]
    %74 = vset.pattern.permute.xlu0 0
    %75 = vperm.xlu0 %74, %v69
    %v76 = vpop.permute.xlu0 %75
    %v78 = vmul.f32 %v76, %v70
    %v79 = vmul.f32 %v76, %v71
    %v80 = vmul.f32 %v76, %v72
    %84 = vrot.lane.b32.xlu0 %v78, 96
    %v85 = vpop.permute.xlu0 %84
    %86 = vrot.lane.b32.xlu0 %v79, 96
    %v87 = vpop.permute.xlu0 %86
    %88 = vrot.lane.b32.xlu0 %v80, 96
    %v89 = vpop.permute.xlu0 %88
    %vm90 = vcmask 785408
    %v91 = vsel %vm90, %v85, %v87
    %v92 = vsel %vm90, %v87, %v89
    %v96 = vadd.f32 %v65, %v85
    %v97 = vadd.f32 %v66, %v91
    %v98 = vadd.f32 %v67, %v92
    %v99 = vld [vmem:[%s2] ss:$4 sm:$0x3]
    %v101 = vlaneseq
    %v102 = vshrl.u32 %v101, 7
    %v103 = vsub.s32 0, %v102
    %v104 = vrot.slane %v99, %v103
    %v105 = vlaneseq
    %v106 = vshrl.u32 %v105, 7
    %v107 = vsub.s32 1, %v106
    %v108 = vrot.slane %v99, %v107
    %109 = vrot.lane.b32.xlu0 %v104, 111
    %v110 = vpop.permute.xlu0 %109
    %111 = vrot.lane.b32.xlu0 %v108, 111
    %v112 = vpop.permute.xlu0 %111
    %vm113 = vcmask 908288
    %v114 = vsel %vm113, %v110, %v112
    %v118 = vmul.f32 %v96, %v110
    %v119 = vmul.f32 %v97, %v114
    %v120 = vmul.f32 %v98, %v112
    %v121 = vadd.f32 %v118, 0.0
    %v122 = vadd.f32 %v119, 0.0
    %v123 = vadd.f32 %v120, 0.0
    %s124 = scalar_lea.vmem %s1, 8
    %v125 = vld [vmem:[%s124] sm:$0xff]
    %127 = vset.pattern.permute.xlu0 0
    %128 = vperm.xlu0 %127, %v125
    %v129 = vpop.permute.xlu0 %128
    %v131 = vmul.f32 %v129, %v26
    %v132 = vmul.f32 %v129, %v27
    %v133 = vmul.f32 %v129, %v28
    %v134 = vadd.f32 %v131, 0.0
    %v135 = vadd.f32 %v132, 0.0
    %v136 = vadd.f32 %v133, 0.0
    %s137 = scalar_lea.vmem %s1, 32
    %v138 = vld [vmem:[%s137] sm:$0xff]
    %140 = vset.pattern.permute.xlu0 0
    %141 = vperm.xlu0 %140, %v138
    %v142 = vpop.permute.xlu0 %141
    %v144 = vmul.f32 %v142, %v27
    %v145 = vmul.f32 %v142, %v28
    %148 = vrot.lane.b32.xlu0 %v144, 112
    %v149 = vpop.permute.xlu0 %148
    %150 = vrot.lane.b32.xlu0 %v145, 112
    %v151 = vpop.permute.xlu0 %150
    %v152 = vsel %vm59, %v149, %v151
    %v156 = vadd.f32 %v134, %v149
    %v157 = vadd.f32 %v135, %v152
    %v158 = vadd.f32 %v136, %v151
    %s159 = scalar_lea.vmem %s1, 56
    %v160 = vld [vmem:[%s159] sm:$0xff]
    %162 = vset.pattern.permute.xlu0 0
    %163 = vperm.xlu0 %162, %v160
    %v164 = vpop.permute.xlu0 %163
    %v166 = vmul.f32 %v164, %v70
    %v167 = vmul.f32 %v164, %v71
    %v168 = vmul.f32 %v164, %v72
    %172 = vrot.lane.b32.xlu0 %v166, 96
    %v173 = vpop.permute.xlu0 %172
    %174 = vrot.lane.b32.xlu0 %v167, 96
    %v175 = vpop.permute.xlu0 %174
    %176 = vrot.lane.b32.xlu0 %v168, 96
    %v177 = vpop.permute.xlu0 %176
    %v178 = vsel %vm90, %v173, %v175
    %v179 = vsel %vm90, %v175, %v177
    %v183 = vadd.f32 %v156, %v173
    %v184 = vadd.f32 %v157, %v178
    %v185 = vadd.f32 %v158, %v179
    %189 = vrot.lane.b32.xlu0 %v183, 127
    %v190 = vpop.permute.xlu0 %189
    %191 = vrot.lane.b32.xlu0 %v184, 127
    %v192 = vpop.permute.xlu0 %191
    %193 = vrot.lane.b32.xlu0 %v185, 127
    %v194 = vpop.permute.xlu0 %193
    %vm195 = vcmask 1039360
    %v196 = vsel %vm195, %v190, %v192
    %v197 = vsel %vm195, %v192, %v194
    %v201 = vadd.f32 %v121, %v196
    %v202 = vadd.f32 %v122, %v197
    %v203 = vadd.f32 %v123, %v194
    %s204 = scalar_lea.vmem %s1, 16
    %v205 = vld [vmem:[%s204] sm:$0xff]
    %207 = vset.pattern.permute.xlu0 0
    %208 = vperm.xlu0 %207, %v205
    %v209 = vpop.permute.xlu0 %208
    %v211 = vmul.f32 %v209, %v26
    %v212 = vmul.f32 %v209, %v27
    %v213 = vmul.f32 %v209, %v28
    %v214 = vadd.f32 %v211, 0.0
    %v215 = vadd.f32 %v212, 0.0
    %v216 = vadd.f32 %v213, 0.0
    %s217 = scalar_lea.vmem %s1, 40
    %v218 = vld [vmem:[%s217] sm:$0xff]
    %220 = vset.pattern.permute.xlu0 0
    %221 = vperm.xlu0 %220, %v218
    %v222 = vpop.permute.xlu0 %221
    %v224 = vmul.f32 %v222, %v70
    %v225 = vmul.f32 %v222, %v71
    %v226 = vmul.f32 %v222, %v72
    %230 = vrot.lane.b32.xlu0 %v224, 112
    %v231 = vpop.permute.xlu0 %230
    %232 = vrot.lane.b32.xlu0 %v225, 112
    %v233 = vpop.permute.xlu0 %232
    %234 = vrot.lane.b32.xlu0 %v226, 112
    %v235 = vpop.permute.xlu0 %234
    %v236 = vsel %vm59, %v231, %v233
    %v237 = vsel %vm59, %v233, %v235
    %v241 = vadd.f32 %v214, %v231
    %v242 = vadd.f32 %v215, %v236
    %v243 = vadd.f32 %v216, %v237
    %s244 = scalar_lea.vmem %s1, 64
    %v245 = vld [vmem:[%s244] sm:$0xff]
    %247 = vset.pattern.permute.xlu0 0
    %248 = vperm.xlu0 %247, %v245
    %v249 = vpop.permute.xlu0 %248
    %v251 = vmul.f32 %v249, %v70
    %v252 = vmul.f32 %v249, %v71
    %v253 = vmul.f32 %v249, %v72
    %257 = vrot.lane.b32.xlu0 %v251, 96
    %v258 = vpop.permute.xlu0 %257
    %259 = vrot.lane.b32.xlu0 %v252, 96
    %v260 = vpop.permute.xlu0 %259
    %261 = vrot.lane.b32.xlu0 %v253, 96
    %v262 = vpop.permute.xlu0 %261
    %v263 = vsel %vm90, %v258, %v260
    %v264 = vsel %vm90, %v260, %v262
    %v268 = vadd.f32 %v241, %v258
    %v269 = vadd.f32 %v242, %v263
    %v270 = vadd.f32 %v243, %v264
    %s271 = scalar_lea.vmem %s2, 2
    %v272 = vld [vmem:[%s271] ss:$4 sm:$0x3]
    %v274 = vlaneseq
    %v275 = vshrl.u32 %v274, 7
    %v276 = vsub.s32 0, %v275
    %v277 = vrot.slane %v272, %v276
    %v278 = vlaneseq
    %v279 = vshrl.u32 %v278, 7
    %v280 = vsub.s32 1, %v279
    %v281 = vrot.slane %v272, %v280
    %282 = vrot.lane.b32.xlu0 %v277, 113
    %v283 = vpop.permute.xlu0 %282
    %284 = vrot.lane.b32.xlu0 %v281, 113
    %v285 = vpop.permute.xlu0 %284
    %vm286 = vcmask 924672
    %v287 = vsel %vm286, %v283, %v285
    %v291 = vmul.f32 %v268, %v283
    %v292 = vmul.f32 %v269, %v287
    %v293 = vmul.f32 %v270, %v285
    %297 = vrot.lane.b32.xlu0 %v291, 126
    %v298 = vpop.permute.xlu0 %297
    %299 = vrot.lane.b32.xlu0 %v292, 126
    %v300 = vpop.permute.xlu0 %299
    %301 = vrot.lane.b32.xlu0 %v293, 126
    %v302 = vpop.permute.xlu0 %301
    %vm303 = vcmask 1031168
    %v304 = vsel %vm303, %v298, %v300
    %v305 = vsel %vm303, %v300, %v302
    %v309 = vadd.f32 %v201, %v304
    %v310 = vadd.f32 %v202, %v305
    %v311 = vadd.f32 %v203, %v302
    %v312 = vld [vmem:[%s3] sm:$0xff]
    %v313 = vld [vmem:[%s3 + $0x8] sm:$0xff]
    %317 = vrot.lane.b32.xlu0 %v309, 17
    %v318 = vpop.permute.xlu0 %317
    %319 = vrot.lane.b32.xlu0 %v310, 17
    %v320 = vpop.permute.xlu0 %319
    %321 = vrot.lane.b32.xlu0 %v311, 17
    %v322 = vpop.permute.xlu0 %321
    %v323 = vsel %vm19, %v318, %v320
    %v324 = vsel %vm19, %v320, %v322
    %vm327 = vcmask 64512
    %v329 = vsel %vm327, %v312, 0
    %v332 = vsel %vm327, %v313, 0
    %334 = vmatprep.subr.mxu0 %v324
    %335 = vmatpush1.msra.mxu0 %v323
    %336 = vmatprep.subr.mxu0 0.0
    %337 = vmatpush1.msra.mxu0 0.0
    %338 = vmatprep.subr.mxu0 0.0
    %339 = vmatpush1.msra.mxu0 0.0
    %340 = vmatprep.subr.mxu0 0.0
    %341 = vmatpush1.msra.mxu0 0.0
    %342 = vmatprep.subr.mxu0 0.0
    %343 = vmatpush1.msra.mxu0 0.0
    %344 = vmatprep.subr.mxu0 0.0
    %345 = vmatpush1.msra.mxu0 0.0
    %346 = vmatprep.subr.mxu0 0.0
    %347 = vmatpush1.msra.mxu0 0.0
    %348 = vmatprep.subr.mxu0 0.0
    %349 = vmatpush1.msra.mxu0 0.0
    %350 = vmatprep.subr.mxu0 0.0
    %351 = vmatpush1.msra.mxu0 0.0
    %352 = vmatprep.subr.mxu0 0.0
    %353 = vmatpush1.msra.mxu0 0.0
    %354 = vmatprep.subr.mxu0 0.0
    %355 = vmatpush1.msra.mxu0 0.0
    %356 = vmatprep.subr.mxu0 0.0
    %357 = vmatpush1.msra.mxu0 0.0
    %358 = vmatprep.subr.mxu0 0.0
    %359 = vmatpush1.msra.mxu0 0.0
    %360 = vmatprep.subr.mxu0 0.0
    %361 = vmatpush1.msra.mxu0 0.0
    %362 = vmatprep.subr.mxu0 0.0
    %363 = vmatpush1.msra.mxu0 0.0
    %364 = vmatprep.subr.mxu0 0.0
    %365 = vmatpush1.msra.mxu0 0.0
    %366 = vmatprep.subr.mxu0 0.0
    %367 = vmatpush1.msra.mxu0 0.0
    %368 = vmatprep.subr.mxu0 0.0
    %369 = vmatpush1.msra.mxu0 0.0
    %370 = vmatprep.subr.mxu0 0.0
    %371 = vmatpush1.msra.mxu0 0.0
    %372 = vmatprep.subr.mxu0 0.0
    %373 = vmatpush1.msra.mxu0 0.0
    %374 = vmatprep.subr.mxu0 0.0
    %375 = vmatpush1.msra.mxu0 0.0
    %376 = vmatprep.subr.mxu0 0.0
    %377 = vmatpush1.msra.mxu0 0.0
    %378 = vmatprep.subr.mxu0 0.0
    %379 = vmatpush1.msra.mxu0 0.0
    %380 = vmatprep.subr.mxu0 0.0
    %381 = vmatpush1.msra.mxu0 0.0
    %382 = vmatprep.subr.mxu0 0.0
    %383 = vmatpush1.msra.mxu0 0.0
    %384 = vmatprep.subr.mxu0 0.0
    %385 = vmatpush1.msra.mxu0 0.0
    %386 = vmatprep.subr.mxu0 0.0
    %387 = vmatpush1.msra.mxu0 0.0
    %388 = vmatprep.subr.mxu0 0.0
    %389 = vmatpush1.msra.mxu0 0.0
    %390 = vmatprep.subr.mxu0 0.0
    %391 = vmatpush1.msra.mxu0 0.0
    %392 = vmatprep.subr.mxu0 0.0
    %393 = vmatpush1.msra.mxu0 0.0
    %394 = vmatprep.subr.mxu0 0.0
    %395 = vmatpush1.msra.mxu0 0.0
    %396 = vmatprep.subr.mxu0 0.0
    %397 = vmatpush1.msra.mxu0 0.0
    %398 = vmatprep.mubr.f32.mxu0 0.0
    %399 = vmatmul.mubr.f32.gmra.mrb[0].mxu0 %v329
    %v400 = vpop.f32.mrb[0].mxu0
    %v401 = vadd.f32 0.0, %v400
    %v402 = vpop.f32.mrb[0].mxu0
    %v403 = vadd.f32 0.0, %v402
    %404 = vmatprep.mubr.f32.mxu0 0.0
    %405 = vmatmul.mubr.f32.gmra.mrb[0].mxu0 %v332
    %v406 = vpop.f32.mrb[0].mxu0
    %v407 = vadd.f32 0.0, %v406
    %v408 = vpop.f32.mrb[0].mxu0
    %v409 = vadd.f32 0.0, %v408
    %410 = vdwg.mxu0
    %411 = vst [vmem:[#allocation3] sm:$0xff] %v401
    %412 = vst [vmem:[#allocation3 + $0x8] sm:$0xff] %v403
    %413 = vst [vmem:[#allocation3 + $0x10] sm:$0xff] %v407
    %414 = vst [vmem:[#allocation3 + $0x18] sm:$0xff] %v409
    // Predicated region
    $region18: #{tpu_custom_call.1} parent=1 // pred_check
      _
    $region19: #{tpu_custom_call.1} parent=1 // pred_check_branch
      %416 = sbr.rel (0) target = $region21
    $region20: #{tpu_custom_call.1} parent=1 // pred_region
      %s418 = ssub.s32 512, 512
      %419 = vsyncadd [#allocation4], %s418
      %s420 = sshll.u32 [#allocation3], 4
      %s421 = int_to_ptr.vmem [resolvable:$true] %s420
      %426 = dma.vmem_to_hbm [thread:$0]  %s421, 512, %s4, [#allocation4], 256, 256, 16
    $region21: #{tpu_custom_call.1} parent=1 // pred_fallthru
      _
    // Predicated region
    $region22: #{tpu_custom_call.1} parent=1 // pred_check
      _
    $region23: #{tpu_custom_call.1} parent=1 // pred_check_branch
      %428 = sbr.rel (0) target = $region25
    $region24: #{tpu_custom_call.1} parent=1 // pred_region
      %429 = dma.done [#allocation4], 512
    $region25: #{tpu_custom_call.1} parent=1 // pred_fallthru
      _
    %430 = vsyncpa [#allocation4], 1

</llo_original>
